<compile_context>
chip_gen: v6e
topology: v6e:2x2x1
jax: 0.10.0
libtpu: 0.0.40
codegen_flags: <defaults>
</compile_context>

<pallas_src>
import functools
import math

import jax
import jax.numpy as jnp
from jax import lax
from jax.experimental import pallas as pl
from jax.experimental.pallas import tpu as pltpu

_LANE = 128
_SUBLANE = 8


def _round_up(x, m):
    return -(-x // m) * m


# --------------------------------------------------------------------------
# Portable counter-based PRNG (pure int32 jnp ops -> works in Mosaic and
# interpret mode, and is bit-exactly reproducible in plain JAX).
# --------------------------------------------------------------------------
def _lsr(x, k):
    # Logical right shift for int32: arithmetic shift then mask off sign bits.
    return (x >> k) & jnp.int32((1 << (32 - k)) - 1)


def _mix32(x):
    # lowbias32 integer finalizer (Wellons); int32 arithmetic wraps mod 2**32.
    x = x ^ _lsr(x, 16)
    x = x * jnp.int32(0x7FEB352D)      # 2146121005
    x = x ^ _lsr(x, 15)
    x = x * jnp.int32(-2073254261)     # 0x846CA68B
    x = x ^ _lsr(x, 16)
    return x


def _counter_uniform(rows, cols, seed):
    """Uniform [0, 1) from global (row, col) coordinates + seed (all int32)."""
    h = _mix32(cols + seed)
    h = _mix32(h + rows * jnp.int32(-1640531535))   # 0x9E3779B1 (golden ratio)
    u24 = _lsr(h, 8)                                # 24 bits, non-negative
    return u24.astype(jnp.float32) * jnp.float32(1.0 / (1 << 24))


# --------------------------------------------------------------------------
# Pallas kernel: hard-concrete sampling for the fused parameter slab
# --------------------------------------------------------------------------
def _hard_concrete_kernel(seed_ref, loc_ref, scale_ref, mask_ref, *, e0, stretch):
    j = pl.program_id(0)            # lane (parameter) block
    i = pl.program_id(1)            # batch block (innermost -> rows stay resident)
    tb, tn = mask_ref.shape

    # Global element coordinates -> PRNG stream independent of the tiling.
    rows = lax.broadcasted_iota(jnp.int32, (tb, tn), 0) + i * tb
    cols = lax.broadcasted_iota(jnp.int32, (tb, tn), 1) + j * tn
    u = _counter_uniform(rows, cols, seed_ref[0])          # (tb, tn) in [0, 1)

    loc = loc_ref[...]                                     # (1, tn) broadcasts
    inv_denom = 1.0 / (jnp.maximum(scale_ref[...], 0.0) + 0.001)   # (1, tn) row

    # log(0.001+u) - log(1-u) fused into a single EUP log of the ratio.
    logits = (jnp.log((0.001 + u) / (1.0 - u)) + loc) * inv_denom
    # sigmoid via a single EUP tanh push instead of exp + reciprocal.
    concrete = 0.5 * jnp.tanh(0.5 * logits) + 0.5
    mask_ref[...] = jnp.clip((concrete + e0) * stretch, 0.0, 1.0).astype(mask_ref.dtype)


def _pick_batch_tile(bsz):
    """Pick tb (multiple of 8) minimising padded-batch waste; prefer larger tb."""
    best = None
    for tb in (256, 128, 64, 32, 16, 8):
        pad = _round_up(max(bsz, tb), tb)
        waste = pad - bsz
        if best is None or waste < best[0]:
            best = (waste, tb, pad)
    _, tb, bsz_pad = best
    return tb, bsz_pad


def sample_hard_concrete_fused(seed, loc_row, scale_row, bsz, endpoints,
                               *, out_dtype=jnp.float32,
                               max_block_bytes=2 * 1024 * 1024):
    """loc_row/scale_row: (n_total,) f32. Returns mask (bsz, n_total) as one
    fused lane-dense slab. out_dtype=jnp.bfloat16 halves write bytes on
    write-bound v5e/v6e if downstream tolerates it."""
    n_total = int(loc_row.shape[0])
    tb, bsz_pad = _pick_batch_tile(int(bsz))

    itemsize = jnp.dtype(out_dtype).itemsize
    n_pad = _round_up(max(n_total, _LANE), _LANE)
    # Whole padded width as one lane block when it fits the VMEM budget
    # (few grid steps, unmasked lane-dense stores); otherwise ~2 MiB blocks.
    max_tn = max(_LANE, (max_block_bytes // (tb * itemsize)) // _LANE * _LANE)
    if n_pad <= max_tn:
        tn = n_pad
    else:
        tn = max_tn
        n_pad = _round_up(n_pad, tn)

    # v7x has 2 TensorCores: give a non-trivial slab >=2 parallel blocks.
    if (n_pad // tn) * (bsz_pad // tb) == 1 and bsz_pad * n_pad >= 262144 and n_pad >= 2 * _LANE:
        tn = _round_up(-(-n_pad // 2), _LANE)
        n_pad = 2 * tn

    loc_p = jnp.pad(loc_row.astype(jnp.float32), (0, n_pad - n_total)).reshape(1, n_pad)
    scale_p = jnp.pad(scale_row.astype(jnp.float32), (0, n_pad - n_total)).reshape(1, n_pad)
    seed = jnp.asarray(seed, dtype=jnp.int32).reshape((1,))

    e0, e1 = float(endpoints[0]), float(endpoints[1])
    kernel = functools.partial(_hard_concrete_kernel, e0=e0, stretch=e1 - e0)

    row_spec = pl.BlockSpec((1, tn), lambda j, i, seed_ref: (0, j))
    slab_spec = pl.BlockSpec((tb, tn), lambda j, i, seed_ref: (i, j))

    mask = pl.pallas_call(
        kernel,
        out_shape=jax.ShapeDtypeStruct((bsz_pad, n_pad), out_dtype),
        grid_spec=pltpu.PrefetchScalarGridSpec(
            num_scalar_prefetch=1,
            grid=(n_pad // tn, bsz_pad // tb),   # batch innermost: rows stay resident
            in_specs=[row_spec, row_spec],
            out_specs=slab_spec,
        ),
        compiler_params=pltpu.CompilerParams(
            dimension_semantics=("parallel", "parallel"),
        ),
    )(seed, loc_p, scale_p)

    return mask[:bsz, :n_total]


# --------------------------------------------------------------------------
# Host-side plumbing (flatten params, per-tensor split, seed derivation)
# --------------------------------------------------------------------------
def _flatten_loc_scale(sampling_params):
    """Flatten every (..., 2) param into lane-aligned loc/scale rows.
    Each tensor's segment is padded to a multiple of 128 lanes so the
    per-tensor mask slices start on lane-tile boundaries."""
    locs, scales, layout = [], [], []
    off = 0
    for k in sampling_params:
        for ts in sampling_params[k]:
            mask_shape = tuple(int(d) for d in ts.shape[:-1])
            n = max(math.prod(mask_shape), 1)
            seg = _round_up(n, _LANE)
            loc = jnp.reshape(ts[..., 0], (-1,)).astype(jnp.float32)
            scale = jnp.reshape(ts[..., 1], (-1,)).astype(jnp.float32)
            locs.append(jnp.pad(loc, (0, seg - n)))
            scales.append(jnp.pad(scale, (0, seg - n)))
            layout.append((k, mask_shape, off, n))
            off += seg
    return jnp.concatenate(locs), jnp.concatenate(scales), layout


def _concat_sampling_params(sampling_params):
    flats = []
    for k in sampling_params:
        for ts in sampling_params[k]:
            flats.append(ts.reshape(-1, ts.shape[-1]) if ts.ndim > 1 else ts[None, :])
    return jnp.concatenate(flats, axis=0)


def _seed_from_key(rng_key):
    """Derive a non-negative int32 seed directly from the key bits (no extra
    threefry launch)."""
    if jnp.issubdtype(rng_key.dtype, jax.dtypes.prng_key):
        kd = jax.random.key_data(rng_key)
    else:
        kd = rng_key
    kd = jnp.ravel(kd).astype(jnp.uint32)
    s = lax.bitcast_convert_type(kd[0] ^ kd[-1], jnp.int32)
    return (s & jnp.int32(0x7FFFFFFF)).reshape((1,))


class MaskSamplerPallas:
    """JAX/Pallas port of MaskSampler.forward()."""
    # TODO(synk): grad-nan hook / fix_nans / take_snapshot / load_snapshot are
    # host-side training utilities with no kernel equivalent; only forward().

    def __init__(self, init_params, hard_concrete_endpoints, n_samples, batch_size):
        self.sampling_params = {
            k: [jnp.asarray(p, dtype=jnp.float32) for p in init_params[k]]
            for k in init_params
        }
        self.endpoints = (float(hard_concrete_endpoints[0]),
                          float(hard_concrete_endpoints[1]))
        self.n_samples = int(n_samples)
        self.batch_size = int(batch_size)
        self.sampled_mask = None

        bsz = self.n_samples * self.batch_size
        endpoints = self.endpoints

        def _fwd(params, seed):
            loc_row, scale_row, layout = _flatten_loc_scale(params)
            mask = sample_hard_concrete_fused(seed, loc_row, scale_row, bsz, endpoints)
            prune_mask = {k: [] for k in params}
            for (k, mask_shape, off, n) in layout:
                prune_mask[k].append(mask[:, off:off + n].reshape((bsz,) + mask_shape))
            return prune_mask, _concat_sampling_params(params)

        # One jitted computation: flatten/pad -> pallas_call -> per-tensor split.
        self._fwd = jax.jit(_fwd)

    def get_sampling_params(self):
        return _concat_sampling_params(self.sampling_params)

    def forward(self, rng_key):
        seed = _seed_from_key(rng_key)
        prune_mask, sp = self._fwd(self.sampling_params, seed)
        self.sampled_mask = prune_mask
        return sp


# --------------------------------------------------------------------------
# Demo + sanity check
# --------------------------------------------------------------------------
if __name__ == "__main__":
    key = jax.random.PRNGKey(0)

    endpoints = (-0.1, 1.1)
    n_samples, batch_size = 2, 4
    bsz = n_samples * batch_size

    k1, k2, k3, k4, kfwd = jax.random.split(key, 5)
    init_params = {
        "attn": [
            jnp.stack(
                [0.1 * jax.random.normal(k1, (4, 32), dtype=jnp.float32),
                 2.0 / 3.0 + 0.01 * jax.random.normal(k2, (4, 32), dtype=jnp.float32)],
                axis=-1)  # (4, 32, 2)
        ],
        "mlp": [
            jnp.stack(
                [0.1 * jax.random.normal(k3, (2, 64), dtype=jnp.float32),
                 2.0 / 3.0 + 0.01 * jax.random.normal(k4, (2, 64), dtype=jnp.float32)],
                axis=-1)  # (2, 64, 2)
        ],
    }

    sampler = MaskSamplerPallas(init_params, endpoints, n_samples, batch_size)
    out_params = jax.block_until_ready(sampler.forward(kfwd))
    for k in sampler.sampled_mask:
        for m in sampler.sampled_mask[k]:
            jax.block_until_ready(m)

    # --- Sanity check: exact module math in plain JAX, same uniforms --------
    loc_row, scale_row, layout = _flatten_loc_scale(sampler.sampling_params)
    n_total = int(loc_row.shape[0])
    seed = _seed_from_key(kfwd)

    rows = jnp.broadcast_to(jnp.arange(bsz, dtype=jnp.int32)[:, None], (bsz, n_total))
    cols = jnp.broadcast_to(jnp.arange(n_total, dtype=jnp.int32)[None, :], (bsz, n_total))
    u = _counter_uniform(rows, cols, seed[0])

    e0, e1 = endpoints
    logits = (jnp.log(0.001 + u) - jnp.log(1.0 - u) + loc_row[None, :]) / (
        jnp.maximum(scale_row, 0.0)[None, :] + 0.001)
    ref = jnp.clip((jax.nn.sigmoid(logits) + e0) * (e1 - e0), 0.0, 1.0)

    ok = out_params.shape == (4 * 32 + 2 * 64, 2)            # (256, 2)
    ok = ok and bool(jnp.allclose(out_params, sampler.get_sampling_params()))

    idx = {k: 0 for k in sampler.sampled_mask}
    for (k, mask_shape, off, n) in layout:
        got = sampler.sampled_mask[k][idx[k]]
        idx[k] += 1
        expect = ref[:, off:off + n].reshape((bsz,) + mask_shape)
        ok = ok and got.shape == (bsz,) + mask_shape
        ok = ok and bool(jnp.allclose(got, expect, atol=2e-3, rtol=2e-3))
        ok = ok and bool(jnp.all(got >= 0.0)) and bool(jnp.all(got <= 1.0))

    print("KERNEL_OK" if ok else "MISMATCH")
</pallas_src>

<mosaic_0001>
module attributes {stable_mosaic.version = 11 : i64} {
  func.func @_hard_concrete_kernel(%arg0: i32, %arg1: i32, %arg2: memref<1xi32, #tpu.memory_space<smem>>, %arg3: memref<1x256xf32, #tpu.memory_space<vmem>>, %arg4: memref<1x256xf32, #tpu.memory_space<vmem>>, %arg5: memref<8x256xf32, #tpu.memory_space<vmem>>) attributes {dimension_semantics = [#tpu.dimension_semantics<parallel>, #tpu.dimension_semantics<parallel>], iteration_bounds = array<i64: 1, 1>, scalar_prefetch = 1 : i64, scratch_operands = 0 : i64, tpu.core_type = #tpu.core_type<tc>, window_params = [{transform_indices = @transform_0, window_bounds = array<i64: 1, 256>}, {transform_indices = @transform_1, window_bounds = array<i64: 1, 256>}, {transform_indices = @transform_2, window_bounds = array<i64: 8, 256>}]} {
    %0 = tpu.iota {dimensions = array<i32: 0>} : vector<8x256xi32>
    %c8_i32 = arith.constant 8 : i32
    %1 = arith.muli %arg1, %c8_i32 : i32
    %2 = vector.broadcast %1 : i32 to vector<8x256xi32>
    %3 = arith.addi %0, %2 : vector<8x256xi32>
    %4 = tpu.iota {dimensions = array<i32: 1>} : vector<8x256xi32>
    %c256_i32 = arith.constant 256 : i32
    %5 = arith.muli %arg0, %c256_i32 : i32
    %6 = vector.broadcast %5 : i32 to vector<8x256xi32>
    %7 = arith.addi %4, %6 : vector<8x256xi32>
    %c0 = arith.constant 0 : index
    %8 = memref.load %arg2[%c0] : memref<1xi32, #tpu.memory_space<smem>>
    %9 = vector.broadcast %8 : i32 to vector<8x256xi32>
    %10 = arith.addi %7, %9 : vector<8x256xi32>
    %c16_i32 = arith.constant 16 : i32
    %11 = vector.broadcast %c16_i32 : i32 to vector<8x256xi32>
    %12 = arith.shrsi %10, %11 : vector<8x256xi32>
    %c65535_i32 = arith.constant 65535 : i32
    %13 = vector.broadcast %c65535_i32 : i32 to vector<8x256xi32>
    %14 = arith.andi %12, %13 : vector<8x256xi32>
    %15 = arith.xori %10, %14 : vector<8x256xi32>
    %c2146121005_i32 = arith.constant 2146121005 : i32
    %16 = vector.broadcast %c2146121005_i32 : i32 to vector<8x256xi32>
    %17 = arith.muli %15, %16 : vector<8x256xi32>
    %c15_i32 = arith.constant 15 : i32
    %18 = vector.broadcast %c15_i32 : i32 to vector<8x256xi32>
    %19 = arith.shrsi %17, %18 : vector<8x256xi32>
    %c131071_i32 = arith.constant 131071 : i32
    %20 = vector.broadcast %c131071_i32 : i32 to vector<8x256xi32>
    %21 = arith.andi %19, %20 : vector<8x256xi32>
    %22 = arith.xori %17, %21 : vector<8x256xi32>
    %c-2073254261_i32 = arith.constant -2073254261 : i32
    %23 = vector.broadcast %c-2073254261_i32 : i32 to vector<8x256xi32>
    %24 = arith.muli %22, %23 : vector<8x256xi32>
    %c16_i32_0 = arith.constant 16 : i32
    %25 = vector.broadcast %c16_i32_0 : i32 to vector<8x256xi32>
    %26 = arith.shrsi %24, %25 : vector<8x256xi32>
    %c65535_i32_1 = arith.constant 65535 : i32
    %27 = vector.broadcast %c65535_i32_1 : i32 to vector<8x256xi32>
    %28 = arith.andi %26, %27 : vector<8x256xi32>
    %29 = arith.xori %24, %28 : vector<8x256xi32>
    %c-1640531535_i32 = arith.constant -1640531535 : i32
    %30 = vector.broadcast %c-1640531535_i32 : i32 to vector<8x256xi32>
    %31 = arith.muli %3, %30 : vector<8x256xi32>
    %32 = arith.addi %29, %31 : vector<8x256xi32>
    %c16_i32_2 = arith.constant 16 : i32
    %33 = vector.broadcast %c16_i32_2 : i32 to vector<8x256xi32>
    %34 = arith.shrsi %32, %33 : vector<8x256xi32>
    %c65535_i32_3 = arith.constant 65535 : i32
    %35 = vector.broadcast %c65535_i32_3 : i32 to vector<8x256xi32>
    %36 = arith.andi %34, %35 : vector<8x256xi32>
    %37 = arith.xori %32, %36 : vector<8x256xi32>
    %c2146121005_i32_4 = arith.constant 2146121005 : i32
    %38 = vector.broadcast %c2146121005_i32_4 : i32 to vector<8x256xi32>
    %39 = arith.muli %37, %38 : vector<8x256xi32>
    %c15_i32_5 = arith.constant 15 : i32
    %40 = vector.broadcast %c15_i32_5 : i32 to vector<8x256xi32>
    %41 = arith.shrsi %39, %40 : vector<8x256xi32>
    %c131071_i32_6 = arith.constant 131071 : i32
    %42 = vector.broadcast %c131071_i32_6 : i32 to vector<8x256xi32>
    %43 = arith.andi %41, %42 : vector<8x256xi32>
    %44 = arith.xori %39, %43 : vector<8x256xi32>
    %c-2073254261_i32_7 = arith.constant -2073254261 : i32
    %45 = vector.broadcast %c-2073254261_i32_7 : i32 to vector<8x256xi32>
    %46 = arith.muli %44, %45 : vector<8x256xi32>
    %c16_i32_8 = arith.constant 16 : i32
    %47 = vector.broadcast %c16_i32_8 : i32 to vector<8x256xi32>
    %48 = arith.shrsi %46, %47 : vector<8x256xi32>
    %c65535_i32_9 = arith.constant 65535 : i32
    %49 = vector.broadcast %c65535_i32_9 : i32 to vector<8x256xi32>
    %50 = arith.andi %48, %49 : vector<8x256xi32>
    %51 = arith.xori %46, %50 : vector<8x256xi32>
    %c8_i32_10 = arith.constant 8 : i32
    %52 = vector.broadcast %c8_i32_10 : i32 to vector<8x256xi32>
    %53 = arith.shrsi %51, %52 : vector<8x256xi32>
    %c16777215_i32 = arith.constant 16777215 : i32
    %54 = vector.broadcast %c16777215_i32 : i32 to vector<8x256xi32>
    %55 = arith.andi %53, %54 : vector<8x256xi32>
    %56 = arith.sitofp %55 : vector<8x256xi32> to vector<8x256xf32>
    %cst = arith.constant 5.96046448E-8 : f32
    %57 = vector.broadcast %cst : f32 to vector<8x256xf32>
    %58 = arith.mulf %56, %57 : vector<8x256xf32>
    %c0_11 = arith.constant 0 : index
    %c0_12 = arith.constant 0 : index
    %59 = vector.load %arg3[%c0_11, %c0_12] : memref<1x256xf32, #tpu.memory_space<vmem>>, vector<1x256xf32>
    %c0_13 = arith.constant 0 : index
    %c0_14 = arith.constant 0 : index
    %60 = vector.load %arg4[%c0_13, %c0_14] : memref<1x256xf32, #tpu.memory_space<vmem>>, vector<1x256xf32>
    %cst_15 = arith.constant 0.000000e+00 : f32
    %61 = vector.broadcast %cst_15 : f32 to vector<1x256xf32>
    %62 = arith.maximumf %60, %61 : vector<1x256xf32>
    %cst_16 = arith.constant 1.000000e-03 : f32
    %63 = vector.broadcast %cst_16 : f32 to vector<1x256xf32>
    %64 = arith.addf %62, %63 : vector<1x256xf32>
    %cst_17 = arith.constant 1.000000e+00 : f32
    %65 = vector.broadcast %cst_17 : f32 to vector<1x256xf32>
    %66 = arith.divf %65, %64 : vector<1x256xf32>
    %cst_18 = arith.constant 1.000000e-03 : f32
    %67 = vector.broadcast %cst_18 : f32 to vector<8x256xf32>
    %68 = arith.addf %67, %58 : vector<8x256xf32>
    %cst_19 = arith.constant 1.000000e+00 : f32
    %69 = vector.broadcast %cst_19 : f32 to vector<8x256xf32>
    %70 = arith.subf %69, %58 : vector<8x256xf32>
    %71 = arith.divf %68, %70 : vector<8x256xf32>
    %72 = math.log %71 : vector<8x256xf32>
    %73 = vector.broadcast %59 : vector<1x256xf32> to vector<8x256xf32>
    %74 = arith.addf %72, %73 : vector<8x256xf32>
    %75 = vector.broadcast %66 : vector<1x256xf32> to vector<8x256xf32>
    %76 = arith.mulf %74, %75 : vector<8x256xf32>
    %cst_20 = arith.constant 5.000000e-01 : f32
    %77 = vector.broadcast %cst_20 : f32 to vector<8x256xf32>
    %78 = arith.mulf %77, %76 : vector<8x256xf32>
    %79 = math.tanh %78 : vector<8x256xf32>
    %cst_21 = arith.constant 5.000000e-01 : f32
    %80 = vector.broadcast %cst_21 : f32 to vector<8x256xf32>
    %81 = arith.mulf %80, %79 : vector<8x256xf32>
    %cst_22 = arith.constant 5.000000e-01 : f32
    %82 = vector.broadcast %cst_22 : f32 to vector<8x256xf32>
    %83 = arith.addf %81, %82 : vector<8x256xf32>
    %cst_23 = arith.constant -1.000000e-01 : f32
    %84 = vector.broadcast %cst_23 : f32 to vector<8x256xf32>
    %85 = arith.addf %83, %84 : vector<8x256xf32>
    %cst_24 = arith.constant 1.200000e+00 : f32
    %86 = vector.broadcast %cst_24 : f32 to vector<8x256xf32>
    %87 = arith.mulf %85, %86 : vector<8x256xf32>
    %cst_25 = arith.constant 0.000000e+00 : f32
    %cst_26 = arith.constant 1.000000e+00 : f32
    %88 = vector.broadcast %cst_25 : f32 to vector<8x256xf32>
    %89 = arith.maximumf %88, %87 : vector<8x256xf32>
    %90 = vector.broadcast %cst_26 : f32 to vector<8x256xf32>
    %91 = arith.minimumf %90, %89 : vector<8x256xf32>
    %c0_27 = arith.constant 0 : index
    %c0_28 = arith.constant 0 : index
    %92 = vector.load %arg5[%c0_27, %c0_28] : memref<8x256xf32, #tpu.memory_space<vmem>>, vector<8x256xf32>
    tpu.vector_store %arg5[%c0_27, %c0_28], %91 {strides = array<i32>} : memref<8x256xf32, #tpu.memory_space<vmem>>, vector<8x256xf32>,
    return
  }
  func.func @transform_0(%arg0: i32, %arg1: i32, %arg2: memref<1xi32, #tpu.memory_space<smem>>) -> (i32, i32) {
    %c0_i32 = arith.constant 0 : i32
    %c0_i32_0 = arith.constant 0 : i32
    return %c0_i32, %arg0 : i32, i32
  }
  func.func @transform_1(%arg0: i32, %arg1: i32, %arg2: memref<1xi32, #tpu.memory_space<smem>>) -> (i32, i32) {
    %c0_i32 = arith.constant 0 : i32
    %c0_i32_0 = arith.constant 0 : i32
    return %c0_i32, %arg0 : i32, i32
  }
  func.func @transform_2(%arg0: i32, %arg1: i32, %arg2: memref<1xi32, #tpu.memory_space<smem>>) -> (i32, i32) {
    %c0_i32 = arith.constant 0 : i32
    return %arg1, %arg0 : i32, i32
  }
}

</mosaic_0001>

<llo_original>
// kernel: squeeze.4
$region0: #{squeeze.4}
  %s0 = inlined_call_operand.vmem [shape: f32[4,32], index: 0, kind: input, shape index: {}]
  %s1 = inlined_call_operand.vmem [shape: f32[128], index: 1, kind: output, shape index: {}]
  $region1: #{squeeze.4} parent=0
    #allocation0 [shape = 'u8[4096]{0}', space=vmem, size = 0x1000, scoped, tag = 'scoped mem for output reshape']
    #allocation1 [shape = 'u8[4096]{0}', space=vmem, size = 0x1000, scoped, tag = 'scoped mem for input reshape']
    %s3 = sshll.u32 1, 4
    %s4 = ssub.s32 %s3, 1
    %v5 = vld [vmem:[%s0] sm:%s4]
    %6 = vst [vmem:[#allocation1] sm:%s4] %v5
    %v7 = vld [vmem:[#allocation1] sm:$0x1]
    %vm8 = vcmask 261120
    %9 = vst.msk [vmem:[#allocation0] sm:$0x1] %vm8, %v7
    %s10 = scalar_lea.vmem [#allocation1], 3
    %v11 = vld [vmem:[%s10] sm:$0x1]
    %12 = vrot.lane.b32.xlu0 %v11, 96
    %v13 = vpop.permute.xlu0 %12
    %vm14 = vcmask 1048320
    %15 = vst.msk [vmem:[#allocation0] sm:$0x1] %vm14, %v13
    %s16 = scalar_lea.vmem [#allocation1], 2
    %v17 = vld [vmem:[%s16] sm:$0x1]
    %18 = vrot.lane.b32.xlu0 %v17, 64
    %v19 = vpop.permute.xlu0 %18
    %vm20 = vcmask 785920
    %21 = vst.msk [vmem:[#allocation0] sm:$0x1] %vm20, %v19
    %s22 = scalar_lea.vmem [#allocation1], 1
    %v23 = vld [vmem:[%s22] sm:$0x1]
    %24 = vrot.lane.b32.xlu0 %v23, 32
    %v25 = vpop.permute.xlu0 %24
    %vm26 = vcmask 523520
    %27 = vst.msk [vmem:[#allocation0] sm:$0x1] %vm26, %v25
    %s29 = sshll.u32 1, 1
    %s30 = ssub.s32 %s29, 1
    %v32 = vld [vmem:[#allocation0] sm:%s30]
    %s33 = sshll.u32 1, 1
    %s34 = ssub.s32 %s33, 1
    %35 = vst [vmem:[%s1] sm:%s34] %v32

// kernel: squeeze.6
$region0: #{squeeze.6}
  %s0 = inlined_call_operand.vmem [shape: f32[2,64], index: 0, kind: input, shape index: {}]
  %s1 = inlined_call_operand.vmem [shape: f32[128], index: 1, kind: output, shape index: {}]
  $region1: #{squeeze.6} parent=0
    #allocation0 [shape = 'u8[4096]{0}', space=vmem, size = 0x1000, scoped, tag = 'scoped mem for output reshape']
    #allocation1 [shape = 'u8[4096]{0}', space=vmem, size = 0x1000, scoped, tag = 'scoped mem for input reshape']
    %s3 = sshll.u32 1, 2
    %s4 = ssub.s32 %s3, 1
    %v5 = vld [vmem:[%s0] sm:%s4]
    %6 = vst [vmem:[#allocation1] sm:%s4] %v5
    %v7 = vld [vmem:[#allocation1] sm:$0x1]
    %vm8 = vcmask 523264
    %9 = vst.msk [vmem:[#allocation0] sm:$0x1] %vm8, %v7
    %s10 = scalar_lea.vmem [#allocation1], 1
    %v11 = vld [vmem:[%s10] sm:$0x1]
    %12 = vrot.lane.b32.xlu0 %v11, 64
    %v13 = vpop.permute.xlu0 %12
    %vm14 = vcmask 1048064
    %15 = vst.msk [vmem:[#allocation0] sm:$0x1] %vm14, %v13
    %s17 = sshll.u32 1, 1
    %s18 = ssub.s32 %s17, 1
    %v20 = vld [vmem:[#allocation0] sm:%s18]
    %s21 = sshll.u32 1, 1
    %s22 = ssub.s32 %s21, 1
    %23 = vst [vmem:[%s1] sm:%s22] %v20

// kernel: _fwd.1
$region0: #{_fwd.1}
  #allocation0 [shape = 'u32[]', space=smem, size = 0x4, offset = 0x4, fixed_abs, tag = 'smem constant byte address 0x4 - core index']
  #allocation1 [shape = 'u32[144,128]{1,0:T(1,128)}', space=vmem, size = 0x12000, scoped, tag = 'internal scratch']
  #allocation2 [shape = 's32[1]{0}', space=sflag, size = 0x4, scoped, tag = 'scoped memory for _fwd.1']
  #allocation3 [shape = 's32[1]{0:T(128)S(6)}', space=smem, size = 0x200, scoped, tag = 'prefetched SMEM operand 0']
  %s0 = inlined_call_operand.<no memory space> [shape: s32[1], index: 0, kind: input, shape index: {}]
  %s1 = inlined_call_operand.vmem [shape: f32[1,256], index: 1, kind: input, shape index: {}]
  %s2 = inlined_call_operand.vmem [shape: f32[1,256], index: 2, kind: input, shape index: {}]
  %s3 = inlined_call_operand.vmem [shape: f32[8,256], index: 3, kind: output, shape index: {}]
  %s4 = sld [smem:[#allocation0]]
  $region18: #{_fwd.1} parent=0
    _
  %s6 = ssub.s32 1, %s4
  %s7 = scalar_select 0, %s6, %s4
  %8 = sst [smem:[#allocation3]] %s0
  // Predicated region
  $region2: #{_fwd.1} parent=0 // pred_check
    _
  $region3: #{_fwd.1} parent=0 // pred_check_branch
    %10 = sbr.rel (0) target = $region5
  $region4: #{_fwd.1} parent=0 // pred_region
    _
  $region5: #{_fwd.1} parent=0 // pred_fallthru
    _
  // Predicated region
  $region6: #{_fwd.1} parent=0 // pred_check
    _
  $region7: #{_fwd.1} parent=0 // pred_check_branch
    %12 = sbr.rel (0) target = $region9
  $region8: #{_fwd.1} parent=0 // pred_region
    _
  $region9: #{_fwd.1} parent=0 // pred_fallthru
    _
  %v13 = vlaneseq
  %v14 = vshrl.u32 %v13, 7
  %s15 = smul.u32 0, 8
  %v16 = vstv %s15
  %v17 = vadd.s32 %v14, %v16
  %v18 = vlaneseq
  %v19 = vand.u32 %v18, 127
  %v20 = vadd.s32 %v19, 128
  %s21 = smul.u32 0, 256
  %v22 = vstv %s21
  %v23 = vadd.s32 %v19, %v22
  %v24 = vadd.s32 %v20, %v22
  %s25 = sld [smem:[#allocation3]]
  %v26 = vstv %s25
  %v27 = vadd.s32 %v23, %v26
  %v28 = vadd.s32 %v24, %v26
  %v29 = vshra.s32 %v27, 16
  %v30 = vshra.s32 %v28, 16
  %v31 = vand.u32 %v29, 65535
  %v32 = vand.u32 %v30, 65535
  %v33 = vxor.u32 %v27, %v31
  %v34 = vxor.u32 %v28, %v32
  %v35 = vmul.u32 %v33, 2146121005
  %v36 = vmul.u32 %v34, 2146121005
  %v37 = vshra.s32 %v35, 15
  %v38 = vshra.s32 %v36, 15
  %v39 = vand.u32 %v37, 131071
  %v40 = vand.u32 %v38, 131071
  %v41 = vxor.u32 %v35, %v39
  %v42 = vxor.u32 %v36, %v40
  %v43 = vmul.u32 %v41, 2221713035
  %v44 = vmul.u32 %v42, 2221713035
  %v45 = vshra.s32 %v43, 16
  %v46 = vshra.s32 %v44, 16
  %v47 = vand.u32 %v45, 65535
  %v48 = vand.u32 %v46, 65535
  %v49 = vxor.u32 %v43, %v47
  %v50 = vxor.u32 %v44, %v48
  %v51 = vmul.u32 %v17, 2654435761
  %v52 = vadd.s32 %v49, %v51
  %v53 = vadd.s32 %v50, %v51
  %v54 = vshra.s32 %v52, 16
  %v55 = vshra.s32 %v53, 16
  %v56 = vand.u32 %v54, 65535
  %v57 = vand.u32 %v55, 65535
  %v58 = vxor.u32 %v52, %v56
  %v59 = vxor.u32 %v53, %v57
  %v60 = vmul.u32 %v58, 2146121005
  %v61 = vmul.u32 %v59, 2146121005
  %v62 = vshra.s32 %v60, 15
  %v63 = vshra.s32 %v61, 15
  %v64 = vand.u32 %v62, 131071
  %v65 = vand.u32 %v63, 131071
  %v66 = vxor.u32 %v60, %v64
  %v67 = vxor.u32 %v61, %v65
  %v68 = vmul.u32 %v66, 2221713035
  %v69 = vmul.u32 %v67, 2221713035
  %v70 = vshra.s32 %v68, 16
  %v71 = vshra.s32 %v69, 16
  %v72 = vand.u32 %v70, 65535
  %v73 = vand.u32 %v71, 65535
  %v74 = vxor.u32 %v68, %v72
  %v75 = vxor.u32 %v69, %v73
  %v76 = vshra.s32 %v74, 8
  %v77 = vshra.s32 %v75, 8
  %v78 = vand.u32 %v76, 16777215
  %v79 = vand.u32 %v77, 16777215
  %v80 = vcvt.s32.f32 %v78
  %v81 = vcvt.s32.f32 %v79
  %v82 = vmul.f32 %v80, 5.9604645e-08
  %v83 = vmul.f32 %v81, 5.9604645e-08
  %v84 = vld [vmem:[%s1] sm:$0x3]
  %v85 = vld [vmem:[%s2] sm:$0x3]
  %v86 = vmax.f32 %v85, 0.0
  %v87 = vadd.f32 %v86, 0.001
  %v88 = vrcp.pop %v87
  %v89 = vmul.f32 1.0, %v88
  %v90 = vadd.f32 %v82, 0.001
  %v91 = vadd.f32 %v83, 0.001
  %v92 = vsub.f32 1.0, %v82
  %v93 = vsub.f32 1.0, %v83
  %v94 = vrcp.pop %v92
  %v95 = vmul.f32 %v90, %v94
  %v96 = vrcp.pop %v93
  %v97 = vmul.f32 %v91, %v96
  %v98 = vlog2.pop %v95
  %v99 = vmul.f32 %v98, 0.6931472
  %v100 = vlog2.pop %v97
  %v101 = vmul.f32 %v100, 0.6931472
  %v103 = vlaneseq
  %v104 = vshrl.u32 %v103, 7
  %v105 = vsub.s32 0, %v104
  %v106 = vrot.slane %v84, %v105
  %v107 = vlaneseq
  %v108 = vshrl.u32 %v107, 7
  %v109 = vsub.s32 1, %v108
  %v110 = vrot.slane %v84, %v109
  %v113 = vadd.f32 %v99, %v106
  %v114 = vadd.f32 %v101, %v110
  %v116 = vlaneseq
  %v117 = vshrl.u32 %v116, 7
  %v118 = vsub.s32 0, %v117
  %v119 = vrot.slane %v89, %v118
  %v120 = vlaneseq
  %v121 = vshrl.u32 %v120, 7
  %v122 = vsub.s32 1, %v121
  %v123 = vrot.slane %v89, %v122
  %v126 = vmul.f32 %v113, %v119
  %v127 = vmul.f32 %v114, %v123
  %v128 = vmul.f32 %v126, 0.5
  %v129 = vmul.f32 %v127, 0.5
  %v130 = vtanh.pop %v128
  %v131 = vtanh.pop %v129
  %v132 = vmul.f32 %v130, 0.5
  %v133 = vmul.f32 %v131, 0.5
  %v134 = vadd.f32 %v132, 0.5
  %v135 = vadd.f32 %v133, 0.5
  %v136 = vadd.f32 %v134, -0.1
  %v137 = vadd.f32 %v135, -0.1
  %v138 = vmul.f32 %v136, 1.2
  %v139 = vmul.f32 %v137, 1.2
  %v140 = vmax.f32 %v138, 0.0
  %v141 = vmax.f32 %v139, 0.0
  %v142 = vmin.f32 %v140, 1.0
  %v143 = vmin.f32 %v141, 1.0
  %144 = vst [vmem:[%s3] sm:$0xff] %v142
  %145 = vst [vmem:[%s3 + $0x8] sm:$0xff] %v143
  // Predicated region
  $region10: #{_fwd.1} parent=0 // pred_check
    _
  $region11: #{_fwd.1} parent=0 // pred_check_branch
    %147 = sbr.rel (0) target = $region13
  $region12: #{_fwd.1} parent=0 // pred_region
    _
  $region13: #{_fwd.1} parent=0 // pred_fallthru
    _
  // Predicated region
  $region14: #{_fwd.1} parent=0 // pred_check
    _
  $region15: #{_fwd.1} parent=0 // pred_check_branch
    %149 = sbr.rel (0) target = $region17
  $region16: #{_fwd.1} parent=0 // pred_region
    _
  $region17: #{_fwd.1} parent=0 // pred_fallthru
    _

</llo_original>
